<compile_context>
chip_gen: v6e
topology: v6e:2x2x1
jax: 0.10.0
libtpu: 0.0.40
codegen_flags: <defaults>
</compile_context>

<pallas_src>
import jax
import jax.numpy as jnp
from jax.experimental import pallas as pl
from jax.experimental.pallas import tpu as pltpu


def _weighted_avg_kernel(w_ref, *refs):
    # w_ref : (N,) float32 scalars in SMEM (scalar prefetch)
    # refs  : N input VMEM tiles of shape (tm, D), followed by the output tile
    x_refs, o_ref = refs[:-1], refs[-1]
    acc = x_refs[0][...].astype(jnp.float32) * w_ref[0]
    for i in range(1, len(x_refs)):                 # N is small & static -> unrolled
        acc = acc + x_refs[i][...].astype(jnp.float32) * w_ref[i]
    o_ref[...] = acc.astype(o_ref.dtype)


def linear_weighted_avg(inputs, weights, *, tm=None, vmem_budget_bytes=24 << 20):
    """inputs: list of N (M, D) arrays (same shape/dtype); weights: (N,) scalars."""
    inputs = [jnp.asarray(x) for x in inputs]
    n = len(inputs)
    m, d = inputs[0].shape
    dtype = inputs[0].dtype
    w = jnp.asarray(weights, jnp.float32).reshape((n,))

    itemsize = jnp.dtype(dtype).itemsize
    if tm is None:
        # Double-buffered VMEM footprint ~= 2 * (N inputs + 1 output) * tm * D * bytes.
        denom = 2 * (n + 1) * d * itemsize
        tm = max(int(vmem_budget_bytes // denom), 8)
    tm = min(int(tm), m)
    if tm < m:
        # keep sublane packing aligned (multiple of 32 covers f32/bf16/int8)
        tm = max((tm // 32) * 32, 8)
    # tm == m  => single block (full-dim block, no (8,128) divisibility needed)

    grid = (pl.cdiv(m, tm),)

    in_specs = [pl.BlockSpec((tm, d), lambda i, w_ref: (i, 0)) for _ in range(n)]
    out_specs = pl.BlockSpec((tm, d), lambda i, w_ref: (i, 0))

    grid_spec = pltpu.PrefetchScalarGridSpec(
        num_scalar_prefetch=1,
        grid=grid,
        in_specs=in_specs,
        out_specs=out_specs,
    )

    cost = pl.CostEstimate(
        flops=2 * n * m * d,
        transcendentals=0,
        bytes_accessed=(n + 1) * m * d * itemsize,
    )

    return pl.pallas_call(
        _weighted_avg_kernel,
        out_shape=jax.ShapeDtypeStruct((m, d), dtype),
        grid_spec=grid_spec,
        cost_estimate=cost,
        compiler_params=pltpu.CompilerParams(
            dimension_semantics=("parallel",),   # megacore-shards M on v7x
            vmem_limit_bytes=48 << 20,           # safe on all gens (v7x has 64 MiB)
        ),
    )(w, *inputs)


if __name__ == "__main__":
    key = jax.random.PRNGKey(0)
    n_inputs = 3
    M, D = 16, 128          # rows (e.g. batch*seq), feature dim

    keys = jax.random.split(key, n_inputs + 1)
    # nn.Parameter(torch.randn(1)) per input -> one scalar per input
    weights = jax.random.normal(keys[0], (n_inputs,), dtype=jnp.float32)
    inputs = [jax.random.normal(keys[i + 1], (M, D), dtype=jnp.float32)
              for i in range(n_inputs)]

    out = jax.block_until_ready(linear_weighted_avg(inputs, weights))
    ref = sum(inp * weights[i] for i, inp in enumerate(inputs))
    assert out.shape == (M, D)
    assert jnp.allclose(out, ref, atol=1e-5, rtol=1e-5), "mismatch vs reference (small)"

    # Exercise the multi-tile + ragged-M path (tm does not divide M).
    M2 = 200
    keys2 = jax.random.split(jax.random.PRNGKey(1), n_inputs)
    inputs2 = [jax.random.normal(keys2[i], (M2, D), dtype=jnp.float32)
               for i in range(n_inputs)]
    out2 = jax.block_until_ready(linear_weighted_avg(inputs2, weights, tm=96))
    ref2 = sum(inp * weights[i] for i, inp in enumerate(inputs2))
    assert out2.shape == (M2, D)
    assert jnp.allclose(out2, ref2, atol=1e-5, rtol=1e-5), "mismatch vs reference (ragged)"

    print("KERNEL_OK")
</pallas_src>

<mosaic_0001>
module attributes {stable_mosaic.version = 11 : i64} {
  func.func @_weighted_avg_kernel(%arg0: i32, %arg1: memref<3xf32, #tpu.memory_space<smem>>, %arg2: memref<16x128xf32, #tpu.memory_space<vmem>>, %arg3: memref<16x128xf32, #tpu.memory_space<vmem>>, %arg4: memref<16x128xf32, #tpu.memory_space<vmem>>, %arg5: memref<16x128xf32, #tpu.memory_space<vmem>>) attributes {dimension_semantics = [#tpu.dimension_semantics<parallel>], iteration_bounds = array<i64: 1>, scalar_prefetch = 1 : i64, scratch_operands = 0 : i64, tpu.core_type = #tpu.core_type<tc>, window_params = [{transform_indices = @transform_0, window_bounds = array<i64: 16, 128>}, {transform_indices = @transform_1, window_bounds = array<i64: 16, 128>}, {transform_indices = @transform_2, window_bounds = array<i64: 16, 128>}, {transform_indices = @transform_3, window_bounds = array<i64: 16, 128>}]} {
    %c0 = arith.constant 0 : index
    %c0_0 = arith.constant 0 : index
    %0 = vector.load %arg2[%c0, %c0_0] : memref<16x128xf32, #tpu.memory_space<vmem>>, vector<16x128xf32>
    %c0_1 = arith.constant 0 : index
    %1 = memref.load %arg1[%c0_1] : memref<3xf32, #tpu.memory_space<smem>>
    %2 = vector.broadcast %1 : f32 to vector<16x128xf32>
    %3 = arith.mulf %0, %2 : vector<16x128xf32>
    %c0_2 = arith.constant 0 : index
    %c0_3 = arith.constant 0 : index
    %4 = vector.load %arg3[%c0_2, %c0_3] : memref<16x128xf32, #tpu.memory_space<vmem>>, vector<16x128xf32>
    %c1 = arith.constant 1 : index
    %5 = memref.load %arg1[%c1] : memref<3xf32, #tpu.memory_space<smem>>
    %6 = vector.broadcast %5 : f32 to vector<16x128xf32>
    %7 = arith.mulf %4, %6 : vector<16x128xf32>
    %8 = arith.addf %3, %7 : vector<16x128xf32>
    %c0_4 = arith.constant 0 : index
    %c0_5 = arith.constant 0 : index
    %9 = vector.load %arg4[%c0_4, %c0_5] : memref<16x128xf32, #tpu.memory_space<vmem>>, vector<16x128xf32>
    %c2 = arith.constant 2 : index
    %10 = memref.load %arg1[%c2] : memref<3xf32, #tpu.memory_space<smem>>
    %11 = vector.broadcast %10 : f32 to vector<16x128xf32>
    %12 = arith.mulf %9, %11 : vector<16x128xf32>
    %13 = arith.addf %8, %12 : vector<16x128xf32>
    %c0_6 = arith.constant 0 : index
    %c0_7 = arith.constant 0 : index
    %14 = vector.load %arg5[%c0_6, %c0_7] : memref<16x128xf32, #tpu.memory_space<vmem>>, vector<16x128xf32>
    tpu.vector_store %arg5[%c0_6, %c0_7], %13 {strides = array<i32>} : memref<16x128xf32, #tpu.memory_space<vmem>>, vector<16x128xf32>,
    return
  }
  func.func @transform_0(%arg0: i32, %arg1: memref<3xf32, #tpu.memory_space<smem>>) -> (i32, i32) {
    %c0_i32 = arith.constant 0 : i32
    %c0_i32_0 = arith.constant 0 : i32
    return %arg0, %c0_i32 : i32, i32
  }
  func.func @transform_1(%arg0: i32, %arg1: memref<3xf32, #tpu.memory_space<smem>>) -> (i32, i32) {
    %c0_i32 = arith.constant 0 : i32
    %c0_i32_0 = arith.constant 0 : i32
    return %arg0, %c0_i32 : i32, i32
  }
  func.func @transform_2(%arg0: i32, %arg1: memref<3xf32, #tpu.memory_space<smem>>) -> (i32, i32) {
    %c0_i32 = arith.constant 0 : i32
    %c0_i32_0 = arith.constant 0 : i32
    return %arg0, %c0_i32 : i32, i32
  }
  func.func @transform_3(%arg0: i32, %arg1: memref<3xf32, #tpu.memory_space<smem>>) -> (i32, i32) {
    %c0_i32 = arith.constant 0 : i32
    %c0_i32_0 = arith.constant 0 : i32
    return %arg0, %c0_i32 : i32, i32
  }
}

</mosaic_0001>

<llo_original>
// kernel: tpu_custom_call.1
$region0: #{tpu_custom_call.1}
  #allocation0 [shape = 'u32[]', space=smem, size = 0x4, offset = 0x4, fixed_abs, tag = 'smem constant byte address 0x4 - core index']
  #allocation1 [shape = 'u32[144,128]{1,0:T(1,128)}', space=vmem, size = 0x12000, scoped, tag = 'internal scratch']
  #allocation2 [shape = 's32[1]{0}', space=sflag, size = 0x4, scoped, tag = 'scoped memory for tpu_custom_call.1']
  #allocation3 [shape = 'u8[512]{0}', space=smem, size = 0x200, scoped, tag = 'prefetched SMEM operand 0']
  %s0 = inlined_call_operand.hbm [shape: f32[3], index: 0, kind: input, shape index: {}]
  %s1 = inlined_call_operand.hbm [shape: f32[16,128], index: 1, kind: input, shape index: {}]
  %s2 = inlined_call_operand.hbm [shape: f32[16,128], index: 2, kind: input, shape index: {}]
  %s3 = inlined_call_operand.hbm [shape: f32[16,128], index: 3, kind: input, shape index: {}]
  %s4 = inlined_call_operand.hbm [shape: f32[16,128], index: 4, kind: output, shape index: {}]
  %s5 = sld [smem:[#allocation0]]
  $region34: #{tpu_custom_call.1} parent=0
    _
  %s7 = ssub.s32 1, %s5
  %s8 = scalar_select 0, %s7, %s5
  %10 = dma.hbm_to_smem %s0, 16, [#allocation3], [#allocation2]
  %11 = dma.done [#allocation2], 16
  %12 = sfence
  $region1: #{tpu_custom_call.1} parent=0
    #allocation4 [shape = 'u8[8192]{0}', space=vmem, size = 0x2000, scoped, tag = 'input window, operand 1, single buffered']
    #allocation5 [shape = 's32[1]{0}', space=sflag, size = 0x4, scoped, tag = 'scoped memory for tpu_custom_call.1']
    #allocation6 [shape = 's32[1]{0}', space=sflag, size = 0x4, scoped, tag = 'scoped memory for tpu_custom_call.1']
    #allocation7 [shape = 'u8[8192]{0}', space=vmem, size = 0x2000, scoped, tag = 'input window, operand 2, single buffered']
    #allocation8 [shape = 's32[1]{0}', space=sflag, size = 0x4, scoped, tag = 'scoped memory for tpu_custom_call.1']
    #allocation9 [shape = 'u8[8192]{0}', space=vmem, size = 0x2000, scoped, tag = 'input window, operand 3, single buffered']
    #allocation10 [shape = 'u8[8192]{0}', space=vmem, size = 0x2000, scoped, tag = 'output window, operand 0, single buffered']
    %13 = vsyncpa [#allocation5], 0
    %14 = vsyncpa [#allocation8], 0
    %15 = vsyncpa [#allocation6], 0
    // Predicated region
    $region2: #{tpu_custom_call.1} parent=1 // pred_check
      _
    $region3: #{tpu_custom_call.1} parent=1 // pred_check_branch
      %17 = sbr.rel (0) target = $region5
    $region4: #{tpu_custom_call.1} parent=1 // pred_region
      %s19 = ssub.s32 256, 256
      %20 = vsyncadd [#allocation5], %s19
      %s21 = sshll.u32 [#allocation4], 4
      %s22 = int_to_ptr.vmem [resolvable:$true] %s21
      %27 = dma.hbm_to_vmem [thread:$0]  %s1, 256, %s22, [#allocation5], 128, 128, 8
    $region5: #{tpu_custom_call.1} parent=1 // pred_fallthru
      _
    // Predicated region
    $region6: #{tpu_custom_call.1} parent=1 // pred_check
      _
    $region7: #{tpu_custom_call.1} parent=1 // pred_check_branch
      %29 = sbr.rel (0) target = $region9
    $region8: #{tpu_custom_call.1} parent=1 // pred_region
      %s31 = ssub.s32 256, 256
      %32 = vsyncadd [#allocation8], %s31
      %s33 = sshll.u32 [#allocation7], 4
      %s34 = int_to_ptr.vmem [resolvable:$true] %s33
      %39 = dma.hbm_to_vmem [thread:$0]  %s2, 256, %s34, [#allocation8], 128, 128, 8
    $region9: #{tpu_custom_call.1} parent=1 // pred_fallthru
      _
    // Predicated region
    $region10: #{tpu_custom_call.1} parent=1 // pred_check
      _
    $region11: #{tpu_custom_call.1} parent=1 // pred_check_branch
      %41 = sbr.rel (0) target = $region13
    $region12: #{tpu_custom_call.1} parent=1 // pred_region
      %s43 = ssub.s32 256, 256
      %44 = vsyncadd [#allocation8], %s43
      %s45 = sshll.u32 [#allocation9], 4
      %s46 = int_to_ptr.vmem [resolvable:$true] %s45
      %51 = dma.hbm_to_vmem [thread:$0]  %s3, 256, %s46, [#allocation8], 128, 128, 8
    $region13: #{tpu_custom_call.1} parent=1 // pred_fallthru
      _
    // Predicated region
    $region14: #{tpu_custom_call.1} parent=1 // pred_check
      _
    $region15: #{tpu_custom_call.1} parent=1 // pred_check_branch
      %53 = sbr.rel (0) target = $region17
    $region16: #{tpu_custom_call.1} parent=1 // pred_region
      %54 = dma.done [#allocation5], 256
    $region17: #{tpu_custom_call.1} parent=1 // pred_fallthru
      _
    // Predicated region
    $region18: #{tpu_custom_call.1} parent=1 // pred_check
      _
    $region19: #{tpu_custom_call.1} parent=1 // pred_check_branch
      %56 = sbr.rel (0) target = $region21
    $region20: #{tpu_custom_call.1} parent=1 // pred_region
      %57 = dma.done [#allocation8], 256
    $region21: #{tpu_custom_call.1} parent=1 // pred_fallthru
      _
    // Predicated region
    $region22: #{tpu_custom_call.1} parent=1 // pred_check
      _
    $region23: #{tpu_custom_call.1} parent=1 // pred_check_branch
      %59 = sbr.rel (0) target = $region25
    $region24: #{tpu_custom_call.1} parent=1 // pred_region
      %60 = dma.done [#allocation8], 256
    $region25: #{tpu_custom_call.1} parent=1 // pred_fallthru
      _
    %v61 = vld [vmem:[#allocation4] sm:$0xff]
    %v62 = vld [vmem:[#allocation4 + $0x8] sm:$0xff]
    %s63 = sld [smem:[#allocation3]]
    %v64 = vstv %s63
    %v65 = vmul.f32 %v61, %v64
    %v66 = vmul.f32 %v62, %v64
    %v67 = vld [vmem:[#allocation7] sm:$0xff]
    %v68 = vld [vmem:[#allocation7 + $0x8] sm:$0xff]
    %s69 = sld [smem:[#allocation3 + $0x1]]
    %v70 = vstv %s69
    %v71 = vmul.f32 %v67, %v70
    %v72 = vmul.f32 %v68, %v70
    %v73 = vadd.f32 %v65, %v71
    %v74 = vadd.f32 %v66, %v72
    %v75 = vld [vmem:[#allocation9] sm:$0xff]
    %v76 = vld [vmem:[#allocation9 + $0x8] sm:$0xff]
    %s77 = sld [smem:[#allocation3 + $0x2]]
    %v78 = vstv %s77
    %v79 = vmul.f32 %v75, %v78
    %v80 = vmul.f32 %v76, %v78
    %v81 = vadd.f32 %v73, %v79
    %v82 = vadd.f32 %v74, %v80
    %83 = vst [vmem:[#allocation10] sm:$0xff] %v81
    %84 = vst [vmem:[#allocation10 + $0x8] sm:$0xff] %v82
    // Predicated region
    $region26: #{tpu_custom_call.1} parent=1 // pred_check
      _
    $region27: #{tpu_custom_call.1} parent=1 // pred_check_branch
      %86 = sbr.rel (0) target = $region29
    $region28: #{tpu_custom_call.1} parent=1 // pred_region
      %s88 = ssub.s32 256, 256
      %89 = vsyncadd [#allocation6], %s88
      %s90 = sshll.u32 [#allocation10], 4
      %s91 = int_to_ptr.vmem [resolvable:$true] %s90
      %96 = dma.vmem_to_hbm [thread:$0]  %s91, 256, %s4, [#allocation6], 128, 128, 8
    $region29: #{tpu_custom_call.1} parent=1 // pred_fallthru
      _
    // Predicated region
    $region30: #{tpu_custom_call.1} parent=1 // pred_check
      _
    $region31: #{tpu_custom_call.1} parent=1 // pred_check_branch
      %98 = sbr.rel (0) target = $region33
    $region32: #{tpu_custom_call.1} parent=1 // pred_region
      %99 = dma.done [#allocation6], 256
    $region33: #{tpu_custom_call.1} parent=1 // pred_fallthru
      _
    %100 = vsyncpa [#allocation5], 1
    %101 = vsyncpa [#allocation8], 1
    %102 = vsyncpa [#allocation6], 1

</llo_original>
